<compile_context>
chip_gen: v6e
topology: v6e:2x2x1
jax: 0.10.0
libtpu: 0.0.40
codegen_flags: <defaults>
</compile_context>

<pallas_src>
from functools import partial

import jax
import jax.numpy as jnp
from jax import lax
from jax.experimental import pallas as pl
from jax.experimental.pallas import tpu as pltpu

BN_EPS = 1e-5


# ---------------------------------------------------------------------------
# Fast path: everything VMEM-resident, single fused kernel.
# ---------------------------------------------------------------------------
def _resident_kernel(n_nodes, c, n_batch, inv_m,
                     s0_ref, s1_ref, w0_ref, w1_ref, o_ref):
    """Fused: 1x1 convs + global BN (batch stats) + node sums + output writes."""
    w0 = w0_ref[...]
    w1 = w1_ref[...]

    y0s, y1s = [], []
    sum0 = jnp.zeros((c, 1), jnp.float32)
    sq0 = jnp.zeros((c, 1), jnp.float32)
    sum1 = jnp.zeros((c, 1), jnp.float32)
    sq1 = jnp.zeros((c, 1), jnp.float32)

    # Pass A: per-batch 1x1 convs (MXU) + streaming per-channel moments.
    for n in range(n_batch):
        y0 = jnp.dot(w0, jnp.maximum(s0_ref[n], 0.0),
                     preferred_element_type=jnp.float32)        # (C, HW)
        y1 = jnp.dot(w1, jnp.maximum(s1_ref[n], 0.0),
                     preferred_element_type=jnp.float32)        # (C, HW)
        y0s.append(y0)
        y1s.append(y1)
        sum0 += jnp.sum(y0, axis=1, keepdims=True)
        sq0 += jnp.sum(y0 * y0, axis=1, keepdims=True)
        sum1 += jnp.sum(y1, axis=1, keepdims=True)
        sq1 += jnp.sum(y1 * y1, axis=1, keepdims=True)

    def scale_shift(s, sq):
        mean = s * inv_m
        var = jnp.maximum(sq * inv_m - mean * mean, 0.0)        # biased batch variance
        inv = lax.rsqrt(var + BN_EPS)
        return inv, -mean * inv

    sc0, sh0 = scale_shift(sum0, sq0)
    sc1, sh1 = scale_shift(sum1, sq1)

    # Pass B (VMEM-resident, no HBM re-read): normalize, build nodes, store slices.
    for n in range(n_batch):
        t0 = y0s[n] * sc0 + sh0
        t1 = y1s[n] * sc1 + sh1
        prev_a, prev_b = t0, t1
        for i in range(n_nodes):
            cur = prev_a + prev_b
            o_ref[n, i * c:(i + 1) * c, :] = cur.astype(o_ref.dtype)
            prev_a, prev_b = prev_b, cur


# ---------------------------------------------------------------------------
# Tiled path: pass 1 -> per-batch partial BN moments.
# ---------------------------------------------------------------------------
def _stats_kernel(s0_ref, s1_ref, w0_ref, w1_ref,
                  sum0_ref, sq0_ref, sum1_ref, sq1_ref):
    @pl.when(pl.program_id(1) == 0)
    def _():
        sum0_ref[...] = jnp.zeros_like(sum0_ref)
        sq0_ref[...] = jnp.zeros_like(sq0_ref)
        sum1_ref[...] = jnp.zeros_like(sum1_ref)
        sq1_ref[...] = jnp.zeros_like(sq1_ref)

    y0 = jnp.dot(w0_ref[...], jnp.maximum(s0_ref[...], 0.0),
                 preferred_element_type=jnp.float32)            # (C, tile)
    y1 = jnp.dot(w1_ref[...], jnp.maximum(s1_ref[...], 0.0),
                 preferred_element_type=jnp.float32)            # (C, tile)
    sum0_ref[...] += jnp.sum(y0, axis=1, keepdims=True)
    sq0_ref[...] += jnp.sum(y0 * y0, axis=1, keepdims=True)
    sum1_ref[...] += jnp.sum(y1, axis=1, keepdims=True)
    sq1_ref[...] += jnp.sum(y1 * y1, axis=1, keepdims=True)


# ---------------------------------------------------------------------------
# Tiled path: pass 2 -> conv with BN folded into weights, node sums, slice stores.
# ---------------------------------------------------------------------------
def _apply_kernel(n_nodes, c,
                  s0_ref, s1_ref, w0_ref, w1_ref, sh0_ref, sh1_ref, o_ref):
    t0 = jnp.dot(w0_ref[...], jnp.maximum(s0_ref[...], 0.0),
                 preferred_element_type=jnp.float32) + sh0_ref[...]
    t1 = jnp.dot(w1_ref[...], jnp.maximum(s1_ref[...], 0.0),
                 preferred_element_type=jnp.float32) + sh1_ref[...]

    # Intermediate nodes: each sums the two most recent tensors (skip_connect,
    # DropPath p=0 == identity).  Direct slice stores -> no concat temp.
    prev_a, prev_b = t0, t1
    for i in range(n_nodes):
        cur = prev_a + prev_b
        o_ref[i * c:(i + 1) * c, :] = cur.astype(o_ref.dtype)
        prev_a, prev_b = prev_b, cur


# ---------------------------------------------------------------------------
# Helpers.
# ---------------------------------------------------------------------------
def _phys_vmem_bytes():
    try:
        info = pltpu.get_tpu_info()
        for attr in ("vmem_capacity_bytes", "vmem_size_bytes", "vmem_bytes"):
            v = getattr(info, attr, None)
            if v:
                return int(v)
    except Exception:
        pass
    return 64 * 1024 * 1024  # conservative default (v7x physical VMEM per TC)


def _pick_tile(hw, budget_elems):
    """Spatial tile: full hw if it fits, else the largest multiple-of-128 divisor
    of hw within the budget (keeps (8,128) block alignment and lane-dense stores)."""
    if hw <= budget_elems:
        return hw
    best_fit = 0
    smallest_aligned = None
    t = 128
    while t <= hw:
        if hw % t == 0:
            if t <= budget_elems:
                best_fit = t
            if smallest_aligned is None:
                smallest_aligned = t
        t += 128
    if best_fit:
        return best_fit
    if smallest_aligned is not None:
        return smallest_aligned   # smallest aligned divisor (may exceed budget a bit)
    # TODO(synk): hw has no multiple-of-128 divisor; single un-tiled block per batch
    # (correct, but lane-masked stores and possibly large VMEM use).
    return hw


# ---------------------------------------------------------------------------
# Wrapper.
# ---------------------------------------------------------------------------
def cell_forward(s0_nchw, s1_nchw, w0, w1, n_nodes, path=None):
    """s0: (N, C_pp, H, W), s1: (N, C_p, H, W), w0: (C, C_pp), w1: (C, C_p)
       -> (N, n_nodes*C, H, W).  path in {None (auto), 'resident', 'tiled'}."""
    N, c_pp, H, W = s0_nchw.shape
    _, c_p, H1, W1 = s1_nchw.shape
    assert (H, W) == (H1, W1)
    C = w0.shape[0]
    assert w1.shape[0] == C
    HW = H * W
    M = N * HW

    # Channel-major 3-D views -- pure reshapes, no transposes.
    s0 = s0_nchw.reshape(N, c_pp, HW).astype(jnp.float32)
    s1 = s1_nchw.reshape(N, c_p, HW).astype(jnp.float32)
    w0 = w0.astype(jnp.float32)
    w1 = w1.astype(jnp.float32)

    phys = _phys_vmem_bytes()
    vmem_limit = int(min(0.8 * phys, 100 * 2 ** 20))

    # Bytes needed to hold inputs + conv outputs + final output fully in VMEM.
    resident_bytes = 4 * N * HW * (c_pp + c_p + 2 * C + n_nodes * C)
    use_resident = (path == "resident") or (
        path is None and resident_bytes <= 0.35 * phys and N <= 32)

    if use_resident:
        vmem_full = pl.BlockSpec(memory_space=pltpu.MemorySpace.VMEM)
        out3d = pl.pallas_call(
            partial(_resident_kernel, n_nodes, C, N, 1.0 / M),
            in_specs=[vmem_full, vmem_full, vmem_full, vmem_full],
            out_specs=vmem_full,
            out_shape=jax.ShapeDtypeStruct((N, n_nodes * C, HW), jnp.float32),
            compiler_params=pltpu.CompilerParams(vmem_limit_bytes=vmem_limit),
        )(s0, s1, w0, w1)
        return out3d.reshape(N, n_nodes * C, H, W)

    # ---- Tiled two-pass path (exact global BN over the whole batch). ----
    per_lane_bytes = 4 * (c_pp + c_p + n_nodes * C)          # pass-2 VMEM per spatial elem
    budget_elems = max(128, (vmem_limit // 2) // (2 * per_lane_bytes))
    tile = _pick_tile(HW, budget_elems)
    n_tiles = HW // tile
    grid = (N, n_tiles)

    s0_spec = pl.BlockSpec((None, c_pp, tile), lambda n, t: (n, 0, t))
    s1_spec = pl.BlockSpec((None, c_p, tile), lambda n, t: (n, 0, t))
    w0_spec = pl.BlockSpec((C, c_pp), lambda n, t: (0, 0))
    w1_spec = pl.BlockSpec((C, c_p), lambda n, t: (0, 0))
    stat_spec = pl.BlockSpec((None, C, 1), lambda n, t: (n, 0, 0))
    stat_shape = jax.ShapeDtypeStruct((N, C, 1), jnp.float32)

    # Pass 1: per-batch partial BN moments (batch axis parallel -> megacore on v7x).
    psum0, psq0, psum1, psq1 = pl.pallas_call(
        _stats_kernel,
        grid=grid,
        in_specs=[s0_spec, s1_spec, w0_spec, w1_spec],
        out_specs=(stat_spec, stat_spec, stat_spec, stat_spec),
        out_shape=(stat_shape, stat_shape, stat_shape, stat_shape),
        compiler_params=pltpu.CompilerParams(
            dimension_semantics=("parallel", "arbitrary"),
            vmem_limit_bytes=vmem_limit),
    )(s0, s1, w0, w1)

    # Finish the tiny reduction in XLA and fold BN into the conv weights.
    def fold(psum, psq, w):
        mean = jnp.sum(psum, axis=0) / M                         # (C, 1)
        var = jnp.maximum(jnp.sum(psq, axis=0) / M - mean * mean, 0.0)
        inv = lax.rsqrt(var + BN_EPS)                            # (C, 1)
        return w * inv, -mean * inv                              # (C, Cin), (C, 1)

    w0s, sh0 = fold(psum0, psq0, w0)
    w1s, sh1 = fold(psum1, psq1, w1)
    sh_spec = pl.BlockSpec((C, 1), lambda n, t: (0, 0))

    # Pass 2: scaled conv + shift + node sums, lane-dense output block.
    out3d = pl.pallas_call(
        partial(_apply_kernel, n_nodes, C),
        grid=grid,
        in_specs=[s0_spec, s1_spec, w0_spec, w1_spec, sh_spec, sh_spec],
        out_specs=pl.BlockSpec((None, n_nodes * C, tile), lambda n, t: (n, 0, t)),
        out_shape=jax.ShapeDtypeStruct((N, n_nodes * C, HW), jnp.float32),
        compiler_params=pltpu.CompilerParams(
            dimension_semantics=("parallel", "parallel"),
            vmem_limit_bytes=vmem_limit),
    )(s0, s1, w0s, w1s, sh0, sh1)

    return out3d.reshape(N, n_nodes * C, H, W)


# ---------------------------------------------------------------------------
# Pure-JAX reference of the same fixed genotype (for correctness check).
# ---------------------------------------------------------------------------
def _reference(s0_nchw, s1_nchw, w0, w1, n_nodes):
    N, c_pp, H, W = s0_nchw.shape
    c_p = s1_nchw.shape[1]
    C = w0.shape[0]
    HW = H * W
    s0 = jnp.maximum(s0_nchw.reshape(N, c_pp, HW), 0.0)
    s1 = jnp.maximum(s1_nchw.reshape(N, c_p, HW), 0.0)
    y0 = jnp.einsum('oc,ncm->nom', w0, s0)
    y1 = jnp.einsum('oc,ncm->nom', w1, s1)

    def bn(y):
        m = jnp.mean(y, axis=(0, 2), keepdims=True)
        v = jnp.mean((y - m) ** 2, axis=(0, 2), keepdims=True)
        return (y - m) * lax.rsqrt(v + BN_EPS)

    tensors = [bn(y0), bn(y1)]
    for _ in range(n_nodes):
        tensors.append(tensors[-2] + tensors[-1])
    out = jnp.concatenate(tensors[2:], axis=1)
    return out.reshape(N, n_nodes * C, H, W)


if __name__ == "__main__":
    # Cell(n_nodes=4, channels_pp=16, channels_p=16, channels=16,
    #      reduction_p=False, reduction=False)
    n_nodes = 4
    N, H, W = 2, 16, 16
    channels_pp, channels_p, channels = 16, 16, 16

    key = jax.random.PRNGKey(0)
    k0, k1, k2, k3 = jax.random.split(key, 4)
    s0 = jax.random.normal(k0, (N, channels_pp, H, W), dtype=jnp.float32)
    s1 = jax.random.normal(k1, (N, channels_p, H, W), dtype=jnp.float32)
    # 1x1 conv weights in PyTorch (C_out, C_in) orientation.
    w0 = 0.1 * jax.random.normal(k2, (channels, channels_pp), dtype=jnp.float32)
    w1 = 0.1 * jax.random.normal(k3, (channels, channels_p), dtype=jnp.float32)

    ref = _reference(s0, s1, w0, w1, n_nodes)

    # Fused VMEM-resident fast path (auto-selected for these shapes).
    out_res = jax.block_until_ready(
        cell_forward(s0, s1, w0, w1, n_nodes, path="resident"))
    # Tiled two-pass path (exercised explicitly so both code paths are validated).
    out_tiled = jax.block_until_ready(
        cell_forward(s0, s1, w0, w1, n_nodes, path="tiled"))

    assert out_res.shape == (N, n_nodes * channels, H, W), out_res.shape
    assert jnp.allclose(out_res, ref, atol=5e-4, rtol=5e-4), \
        float(jnp.max(jnp.abs(out_res - ref)))
    assert jnp.allclose(out_tiled, ref, atol=5e-4, rtol=5e-4), \
        float(jnp.max(jnp.abs(out_tiled - ref)))

    print("KERNEL_OK")
</pallas_src>

<mosaic_0001>
module attributes {stable_mosaic.version = 11 : i64} {
  func.func @_resident_kernel(%arg0: memref<2x16x256xf32, #tpu.memory_space<vmem>>, %arg1: memref<2x16x256xf32, #tpu.memory_space<vmem>>, %arg2: memref<16x16xf32, #tpu.memory_space<vmem>>, %arg3: memref<16x16xf32, #tpu.memory_space<vmem>>, %arg4: memref<2x64x256xf32, #tpu.memory_space<vmem>>) attributes {dimension_semantics = [], scalar_prefetch = 0 : i64, scratch_operands = 0 : i64, tpu.core_type = #tpu.core_type<tc>} {
    %c0 = arith.constant 0 : index
    %c0_0 = arith.constant 0 : index
    %0 = vector.load %arg2[%c0, %c0_0] : memref<16x16xf32, #tpu.memory_space<vmem>>, vector<16x16xf32>
    %c0_1 = arith.constant 0 : index
    %c0_2 = arith.constant 0 : index
    %1 = vector.load %arg3[%c0_1, %c0_2] : memref<16x16xf32, #tpu.memory_space<vmem>>, vector<16x16xf32>
    %cst = arith.constant 0.000000e+00 : f32
    %2 = vector.broadcast %cst : f32 to vector<16x1xf32>
    %cst_3 = arith.constant 0.000000e+00 : f32
    %3 = vector.broadcast %cst_3 : f32 to vector<16x1xf32>
    %cst_4 = arith.constant 0.000000e+00 : f32
    %4 = vector.broadcast %cst_4 : f32 to vector<16x1xf32>
    %cst_5 = arith.constant 0.000000e+00 : f32
    %5 = vector.broadcast %cst_5 : f32 to vector<16x1xf32>
    %c0_6 = arith.constant 0 : index
    %c0_7 = arith.constant 0 : index
    %c0_8 = arith.constant 0 : index
    %6 = vector.load %arg0[%c0_6, %c0_7, %c0_8] : memref<2x16x256xf32, #tpu.memory_space<vmem>>, vector<1x16x256xf32>
    %7 = vector.shape_cast %6 : vector<1x16x256xf32> to vector<16x256xf32>
    %cst_9 = arith.constant 0.000000e+00 : f32
    %8 = vector.broadcast %cst_9 : f32 to vector<16x256xf32>
    %9 = arith.maximumf %7, %8 : vector<16x256xf32>
    %cst_10 = arith.constant dense<0.000000e+00> : vector<16x256xf32>
    %10 = tpu.matmul %0, %9, %cst_10 {dimension_numbers = #tpu.dot_dimension_numbers<[1], [0], [0], [1], [0, 0, 1, 1], [], []>} : vector<16x16xf32>, vector<16x256xf32>, vector<16x256xf32> -> vector<16x256xf32>
    %c0_11 = arith.constant 0 : index
    %c0_12 = arith.constant 0 : index
    %c0_13 = arith.constant 0 : index
    %11 = vector.load %arg1[%c0_11, %c0_12, %c0_13] : memref<2x16x256xf32, #tpu.memory_space<vmem>>, vector<1x16x256xf32>
    %12 = vector.shape_cast %11 : vector<1x16x256xf32> to vector<16x256xf32>
    %cst_14 = arith.constant 0.000000e+00 : f32
    %13 = vector.broadcast %cst_14 : f32 to vector<16x256xf32>
    %14 = arith.maximumf %12, %13 : vector<16x256xf32>
    %cst_15 = arith.constant dense<0.000000e+00> : vector<16x256xf32>
    %15 = tpu.matmul %1, %14, %cst_15 {dimension_numbers = #tpu.dot_dimension_numbers<[1], [0], [0], [1], [0, 0, 1, 1], [], []>} : vector<16x16xf32>, vector<16x256xf32>, vector<16x256xf32> -> vector<16x256xf32>
    %cst_16 = arith.constant dense<0.000000e+00> : vector<16xf32>
    %16 = vector.multi_reduction <add>, %10, %cst_16 [1] : vector<16x256xf32> to vector<16xf32>
    %17 = vector.shape_cast %16 : vector<16xf32> to vector<16x1xf32>
    %18 = arith.addf %2, %17 : vector<16x1xf32>
    %19 = arith.mulf %10, %10 : vector<16x256xf32>
    %cst_17 = arith.constant dense<0.000000e+00> : vector<16xf32>
    %20 = vector.multi_reduction <add>, %19, %cst_17 [1] : vector<16x256xf32> to vector<16xf32>
    %21 = vector.shape_cast %20 : vector<16xf32> to vector<16x1xf32>
    %22 = arith.addf %3, %21 : vector<16x1xf32>
    %cst_18 = arith.constant dense<0.000000e+00> : vector<16xf32>
    %23 = vector.multi_reduction <add>, %15, %cst_18 [1] : vector<16x256xf32> to vector<16xf32>
    %24 = vector.shape_cast %23 : vector<16xf32> to vector<16x1xf32>
    %25 = arith.addf %4, %24 : vector<16x1xf32>
    %26 = arith.mulf %15, %15 : vector<16x256xf32>
    %cst_19 = arith.constant dense<0.000000e+00> : vector<16xf32>
    %27 = vector.multi_reduction <add>, %26, %cst_19 [1] : vector<16x256xf32> to vector<16xf32>
    %28 = vector.shape_cast %27 : vector<16xf32> to vector<16x1xf32>
    %29 = arith.addf %5, %28 : vector<16x1xf32>
    %c1 = arith.constant 1 : index
    %c0_20 = arith.constant 0 : index
    %c0_21 = arith.constant 0 : index
    %30 = vector.load %arg0[%c1, %c0_20, %c0_21] : memref<2x16x256xf32, #tpu.memory_space<vmem>>, vector<1x16x256xf32>
    %31 = vector.shape_cast %30 : vector<1x16x256xf32> to vector<16x256xf32>
    %cst_22 = arith.constant 0.000000e+00 : f32
    %32 = vector.broadcast %cst_22 : f32 to vector<16x256xf32>
    %33 = arith.maximumf %31, %32 : vector<16x256xf32>
    %cst_23 = arith.constant dense<0.000000e+00> : vector<16x256xf32>
    %34 = tpu.matmul %0, %33, %cst_23 {dimension_numbers = #tpu.dot_dimension_numbers<[1], [0], [0], [1], [0, 0, 1, 1], [], []>} : vector<16x16xf32>, vector<16x256xf32>, vector<16x256xf32> -> vector<16x256xf32>
    %c1_24 = arith.constant 1 : index
    %c0_25 = arith.constant 0 : index
    %c0_26 = arith.constant 0 : index
    %35 = vector.load %arg1[%c1_24, %c0_25, %c0_26] : memref<2x16x256xf32, #tpu.memory_space<vmem>>, vector<1x16x256xf32>
    %36 = vector.shape_cast %35 : vector<1x16x256xf32> to vector<16x256xf32>
    %cst_27 = arith.constant 0.000000e+00 : f32
    %37 = vector.broadcast %cst_27 : f32 to vector<16x256xf32>
    %38 = arith.maximumf %36, %37 : vector<16x256xf32>
    %cst_28 = arith.constant dense<0.000000e+00> : vector<16x256xf32>
    %39 = tpu.matmul %1, %38, %cst_28 {dimension_numbers = #tpu.dot_dimension_numbers<[1], [0], [0], [1], [0, 0, 1, 1], [], []>} : vector<16x16xf32>, vector<16x256xf32>, vector<16x256xf32> -> vector<16x256xf32>
    %cst_29 = arith.constant dense<0.000000e+00> : vector<16xf32>
    %40 = vector.multi_reduction <add>, %34, %cst_29 [1] : vector<16x256xf32> to vector<16xf32>
    %41 = vector.shape_cast %40 : vector<16xf32> to vector<16x1xf32>
    %42 = arith.addf %18, %41 : vector<16x1xf32>
    %43 = arith.mulf %34, %34 : vector<16x256xf32>
    %cst_30 = arith.constant dense<0.000000e+00> : vector<16xf32>
    %44 = vector.multi_reduction <add>, %43, %cst_30 [1] : vector<16x256xf32> to vector<16xf32>
    %45 = vector.shape_cast %44 : vector<16xf32> to vector<16x1xf32>
    %46 = arith.addf %22, %45 : vector<16x1xf32>
    %cst_31 = arith.constant dense<0.000000e+00> : vector<16xf32>
    %47 = vector.multi_reduction <add>, %39, %cst_31 [1] : vector<16x256xf32> to vector<16xf32>
    %48 = vector.shape_cast %47 : vector<16xf32> to vector<16x1xf32>
    %49 = arith.addf %25, %48 : vector<16x1xf32>
    %50 = arith.mulf %39, %39 : vector<16x256xf32>
    %cst_32 = arith.constant dense<0.000000e+00> : vector<16xf32>
    %51 = vector.multi_reduction <add>, %50, %cst_32 [1] : vector<16x256xf32> to vector<16xf32>
    %52 = vector.shape_cast %51 : vector<16xf32> to vector<16x1xf32>
    %53 = arith.addf %29, %52 : vector<16x1xf32>
    %cst_33 = arith.constant 0.001953125 : f32
    %54 = vector.broadcast %cst_33 : f32 to vector<16x1xf32>
    %55 = arith.mulf %42, %54 : vector<16x1xf32>
    %cst_34 = arith.constant 0.001953125 : f32
    %56 = vector.broadcast %cst_34 : f32 to vector<16x1xf32>
    %57 = arith.mulf %46, %56 : vector<16x1xf32>
    %58 = arith.mulf %55, %55 : vector<16x1xf32>
    %59 = arith.subf %57, %58 : vector<16x1xf32>
    %cst_35 = arith.constant 0.000000e+00 : f32
    %60 = vector.broadcast %cst_35 : f32 to vector<16x1xf32>
    %61 = arith.maximumf %59, %60 : vector<16x1xf32>
    %cst_36 = arith.constant 9.99999974E-6 : f32
    %62 = vector.broadcast %cst_36 : f32 to vector<16x1xf32>
    %63 = arith.addf %61, %62 : vector<16x1xf32>
    %64 = math.rsqrt %63 : vector<16x1xf32>
    %cst_37 = arith.constant 0.000000e+00 : f32
    %65 = vector.broadcast %cst_37 : f32 to vector<16x1xf32>
    %66 = arith.subf %65, %55 : vector<16x1xf32>
    %67 = arith.mulf %66, %64 : vector<16x1xf32>
    %cst_38 = arith.constant 0.001953125 : f32
    %68 = vector.broadcast %cst_38 : f32 to vector<16x1xf32>
    %69 = arith.mulf %49, %68 : vector<16x1xf32>
    %cst_39 = arith.constant 0.001953125 : f32
    %70 = vector.broadcast %cst_39 : f32 to vector<16x1xf32>
    %71 = arith.mulf %53, %70 : vector<16x1xf32>
    %72 = arith.mulf %69, %69 : vector<16x1xf32>
    %73 = arith.subf %71, %72 : vector<16x1xf32>
    %cst_40 = arith.constant 0.000000e+00 : f32
    %74 = vector.broadcast %cst_40 : f32 to vector<16x1xf32>
    %75 = arith.maximumf %73, %74 : vector<16x1xf32>
    %cst_41 = arith.constant 9.99999974E-6 : f32
    %76 = vector.broadcast %cst_41 : f32 to vector<16x1xf32>
    %77 = arith.addf %75, %76 : vector<16x1xf32>
    %78 = math.rsqrt %77 : vector<16x1xf32>
    %cst_42 = arith.constant 0.000000e+00 : f32
    %79 = vector.broadcast %cst_42 : f32 to vector<16x1xf32>
    %80 = arith.subf %79, %69 : vector<16x1xf32>
    %81 = arith.mulf %80, %78 : vector<16x1xf32>
    %82 = vector.broadcast %64 : vector<16x1xf32> to vector<16x256xf32>
    %83 = arith.mulf %10, %82 : vector<16x256xf32>
    %84 = vector.broadcast %67 : vector<16x1xf32> to vector<16x256xf32>
    %85 = arith.addf %83, %84 : vector<16x256xf32>
    %86 = vector.broadcast %78 : vector<16x1xf32> to vector<16x256xf32>
    %87 = arith.mulf %15, %86 : vector<16x256xf32>
    %88 = vector.broadcast %81 : vector<16x1xf32> to vector<16x256xf32>
    %89 = arith.addf %87, %88 : vector<16x256xf32>
    %90 = arith.addf %85, %89 : vector<16x256xf32>
    %c0_43 = arith.constant 0 : index
    %c0_44 = arith.constant 0 : index
    %c0_45 = arith.constant 0 : index
    %91 = vector.load %arg4[%c0_43, %c0_44, %c0_45] : memref<2x64x256xf32, #tpu.memory_space<vmem>>, vector<1x16x256xf32>
    %92 = vector.shape_cast %91 : vector<1x16x256xf32> to vector<16x256xf32>
    %93 = vector.shape_cast %90 : vector<16x256xf32> to vector<1x16x256xf32>
    tpu.vector_store %arg4[%c0_43, %c0_44, %c0_45], %93 {strides = array<i32>} : memref<2x64x256xf32, #tpu.memory_space<vmem>>, vector<1x16x256xf32>,
    %94 = arith.addf %89, %90 : vector<16x256xf32>
    %c0_46 = arith.constant 0 : index
    %c16 = arith.constant 16 : index
    %c0_47 = arith.constant 0 : index
    %95 = vector.load %arg4[%c0_46, %c16, %c0_47] : memref<2x64x256xf32, #tpu.memory_space<vmem>>, vector<1x16x256xf32>
    %96 = vector.shape_cast %95 : vector<1x16x256xf32> to vector<16x256xf32>
    %97 = vector.shape_cast %94 : vector<16x256xf32> to vector<1x16x256xf32>
    tpu.vector_store %arg4[%c0_46, %c16, %c0_47], %97 {strides = array<i32>} : memref<2x64x256xf32, #tpu.memory_space<vmem>>, vector<1x16x256xf32>,
    %98 = arith.addf %90, %94 : vector<16x256xf32>
    %c0_48 = arith.constant 0 : index
    %c32 = arith.constant 32 : index
    %c0_49 = arith.constant 0 : index
    %99 = vector.load %arg4[%c0_48, %c32, %c0_49] : memref<2x64x256xf32, #tpu.memory_space<vmem>>, vector<1x16x256xf32>
    %100 = vector.shape_cast %99 : vector<1x16x256xf32> to vector<16x256xf32>
    %101 = vector.shape_cast %98 : vector<16x256xf32> to vector<1x16x256xf32>
    tpu.vector_store %arg4[%c0_48, %c32, %c0_49], %101 {strides = array<i32>} : memref<2x64x256xf32, #tpu.memory_space<vmem>>, vector<1x16x256xf32>,
    %102 = arith.addf %94, %98 : vector<16x256xf32>
    %c0_50 = arith.constant 0 : index
    %c48 = arith.constant 48 : index
    %c0_51 = arith.constant 0 : index
    %103 = vector.load %arg4[%c0_50, %c48, %c0_51] : memref<2x64x256xf32, #tpu.memory_space<vmem>>, vector<1x16x256xf32>
    %104 = vector.shape_cast %103 : vector<1x16x256xf32> to vector<16x256xf32>
    %105 = vector.shape_cast %102 : vector<16x256xf32> to vector<1x16x256xf32>
    tpu.vector_store %arg4[%c0_50, %c48, %c0_51], %105 {strides = array<i32>} : memref<2x64x256xf32, #tpu.memory_space<vmem>>, vector<1x16x256xf32>,
    %106 = vector.broadcast %64 : vector<16x1xf32> to vector<16x256xf32>
    %107 = arith.mulf %34, %106 : vector<16x256xf32>
    %108 = vector.broadcast %67 : vector<16x1xf32> to vector<16x256xf32>
    %109 = arith.addf %107, %108 : vector<16x256xf32>
    %110 = vector.broadcast %78 : vector<16x1xf32> to vector<16x256xf32>
    %111 = arith.mulf %39, %110 : vector<16x256xf32>
    %112 = vector.broadcast %81 : vector<16x1xf32> to vector<16x256xf32>
    %113 = arith.addf %111, %112 : vector<16x256xf32>
    %114 = arith.addf %109, %113 : vector<16x256xf32>
    %c1_52 = arith.constant 1 : index
    %c0_53 = arith.constant 0 : index
    %c0_54 = arith.constant 0 : index
    %115 = vector.load %arg4[%c1_52, %c0_53, %c0_54] : memref<2x64x256xf32, #tpu.memory_space<vmem>>, vector<1x16x256xf32>
    %116 = vector.shape_cast %115 : vector<1x16x256xf32> to vector<16x256xf32>
    %117 = vector.shape_cast %114 : vector<16x256xf32> to vector<1x16x256xf32>
    tpu.vector_store %arg4[%c1_52, %c0_53, %c0_54], %117 {strides = array<i32>} : memref<2x64x256xf32, #tpu.memory_space<vmem>>, vector<1x16x256xf32>,
    %118 = arith.addf %113, %114 : vector<16x256xf32>
    %c1_55 = arith.constant 1 : index
    %c16_56 = arith.constant 16 : index
    %c0_57 = arith.constant 0 : index
    %119 = vector.load %arg4[%c1_55, %c16_56, %c0_57] : memref<2x64x256xf32, #tpu.memory_space<vmem>>, vector<1x16x256xf32>
    %120 = vector.shape_cast %119 : vector<1x16x256xf32> to vector<16x256xf32>
    %121 = vector.shape_cast %118 : vector<16x256xf32> to vector<1x16x256xf32>
    tpu.vector_store %arg4[%c1_55, %c16_56, %c0_57], %121 {strides = array<i32>} : memref<2x64x256xf32, #tpu.memory_space<vmem>>, vector<1x16x256xf32>,
    %122 = arith.addf %114, %118 : vector<16x256xf32>
    %c1_58 = arith.constant 1 : index
    %c32_59 = arith.constant 32 : index
    %c0_60 = arith.constant 0 : index
    %123 = vector.load %arg4[%c1_58, %c32_59, %c0_60] : memref<2x64x256xf32, #tpu.memory_space<vmem>>, vector<1x16x256xf32>
    %124 = vector.shape_cast %123 : vector<1x16x256xf32> to vector<16x256xf32>
    %125 = vector.shape_cast %122 : vector<16x256xf32> to vector<1x16x256xf32>
    tpu.vector_store %arg4[%c1_58, %c32_59, %c0_60], %125 {strides = array<i32>} : memref<2x64x256xf32, #tpu.memory_space<vmem>>, vector<1x16x256xf32>,
    %126 = arith.addf %118, %122 : vector<16x256xf32>
    %c1_61 = arith.constant 1 : index
    %c48_62 = arith.constant 48 : index
    %c0_63 = arith.constant 0 : index
    %127 = vector.load %arg4[%c1_61, %c48_62, %c0_63] : memref<2x64x256xf32, #tpu.memory_space<vmem>>, vector<1x16x256xf32>
    %128 = vector.shape_cast %127 : vector<1x16x256xf32> to vector<16x256xf32>
    %129 = vector.shape_cast %126 : vector<16x256xf32> to vector<1x16x256xf32>
    tpu.vector_store %arg4[%c1_61, %c48_62, %c0_63], %129 {strides = array<i32>} : memref<2x64x256xf32, #tpu.memory_space<vmem>>, vector<1x16x256xf32>,
    return
  }
}

</mosaic_0001>

<llo_original>
// kernel: tpu_custom_call.1
$region0: #{tpu_custom_call.1}
  #allocation0 [shape = 'u32[]', space=smem, size = 0x4, offset = 0x4, fixed_abs, tag = 'smem constant byte address 0x4 - core index']
  #allocation1 [shape = 'u32[144,128]{1,0:T(1,128)}', space=vmem, size = 0x12000, scoped, tag = 'internal scratch']
  %s0 = inlined_call_operand.hbm [shape: f32[2,16,256], index: 0, kind: input, shape index: {}]
  %s1 = inlined_call_operand.hbm [shape: f32[2,16,256], index: 1, kind: input, shape index: {}]
  %s2 = inlined_call_operand.hbm [shape: f32[16,16], index: 2, kind: input, shape index: {}]
  %s3 = inlined_call_operand.hbm [shape: f32[16,16], index: 3, kind: input, shape index: {}]
  %s4 = inlined_call_operand.hbm [shape: f32[2,64,256], index: 4, kind: output, shape index: {}]
  %s5 = sld [smem:[#allocation0]]
  $region42: #{tpu_custom_call.1} parent=0
    _
  %s7 = ssub.s32 1, %s5
  %s8 = scalar_select 0, %s7, %s5
  $region1: #{tpu_custom_call.1} parent=0
    #allocation2 [shape = 'u8[32768]{0}', space=vmem, size = 0x8000, scoped, tag = 'input window, operand 0, single buffered']
    #allocation3 [shape = 's32[1]{0}', space=sflag, size = 0x4, scoped, tag = 'scoped memory for tpu_custom_call.1']
    #allocation4 [shape = 's32[1]{0}', space=sflag, size = 0x4, scoped, tag = 'scoped memory for tpu_custom_call.1']
    #allocation5 [shape = 'u8[32768]{0}', space=vmem, size = 0x8000, scoped, tag = 'input window, operand 1, single buffered']
    #allocation6 [shape = 's32[1]{0}', space=sflag, size = 0x4, scoped, tag = 'scoped memory for tpu_custom_call.1']
    #allocation7 [shape = 'u8[8192]{0}', space=vmem, size = 0x2000, scoped, tag = 'input window, operand 2, single buffered']
    #allocation8 [shape = 'u8[8192]{0}', space=vmem, size = 0x2000, scoped, tag = 'input window, operand 3, single buffered']
    #allocation9 [shape = 's32[1]{0}', space=sflag, size = 0x4, scoped, tag = 'scoped memory for tpu_custom_call.1']
    #allocation10 [shape = 'u8[131072]{0}', space=vmem, size = 0x20000, scoped, tag = 'output window, operand 0, single buffered']
    %9 = vsyncpa [#allocation3], 0
    %10 = vsyncpa [#allocation6], 0
    %11 = vsyncpa [#allocation9], 0
    %12 = vsyncpa [#allocation4], 0
    // Predicated region
    $region2: #{tpu_custom_call.1} parent=1 // pred_check
      _
    $region3: #{tpu_custom_call.1} parent=1 // pred_check_branch
      %14 = sbr.rel (0) target = $region5
    $region4: #{tpu_custom_call.1} parent=1 // pred_region
      %s16 = ssub.s32 1024, 1024
      %17 = vsyncadd [#allocation3], %s16
      %s18 = sshll.u32 [#allocation2], 4
      %s19 = int_to_ptr.vmem [resolvable:$true] %s18
      %24 = dma.hbm_to_vmem [thread:$0]  %s0, 1024, %s19, [#allocation3], 256, 256, 16
    $region5: #{tpu_custom_call.1} parent=1 // pred_fallthru
      _
    // Predicated region
    $region6: #{tpu_custom_call.1} parent=1 // pred_check
      _
    $region7: #{tpu_custom_call.1} parent=1 // pred_check_branch
      %26 = sbr.rel (0) target = $region9
    $region8: #{tpu_custom_call.1} parent=1 // pred_region
      %s28 = ssub.s32 1024, 1024
      %29 = vsyncadd [#allocation6], %s28
      %s30 = sshll.u32 [#allocation5], 4
      %s31 = int_to_ptr.vmem [resolvable:$true] %s30
      %36 = dma.hbm_to_vmem [thread:$0]  %s1, 1024, %s31, [#allocation6], 256, 256, 16
    $region9: #{tpu_custom_call.1} parent=1 // pred_fallthru
      _
    // Predicated region
    $region10: #{tpu_custom_call.1} parent=1 // pred_check
      _
    $region11: #{tpu_custom_call.1} parent=1 // pred_check_branch
      %38 = sbr.rel (0) target = $region13
    $region12: #{tpu_custom_call.1} parent=1 // pred_region
      %s40 = ssub.s32 256, 256
      %41 = vsyncadd [#allocation6], %s40
      %s42 = sshll.u32 [#allocation7], 4
      %s43 = int_to_ptr.vmem [resolvable:$true] %s42
      %48 = dma.hbm_to_vmem [thread:$0]  %s2, 256, %s43, [#allocation6], 128, 128, 8
    $region13: #{tpu_custom_call.1} parent=1 // pred_fallthru
      _
    // Predicated region
    $region14: #{tpu_custom_call.1} parent=1 // pred_check
      _
    $region15: #{tpu_custom_call.1} parent=1 // pred_check_branch
      %50 = sbr.rel (0) target = $region17
    $region16: #{tpu_custom_call.1} parent=1 // pred_region
      %s52 = ssub.s32 256, 256
      %53 = vsyncadd [#allocation9], %s52
      %s54 = sshll.u32 [#allocation8], 4
      %s55 = int_to_ptr.vmem [resolvable:$true] %s54
      %60 = dma.hbm_to_vmem [thread:$0]  %s3, 256, %s55, [#allocation9], 128, 128, 8
    $region17: #{tpu_custom_call.1} parent=1 // pred_fallthru
      _
    // Predicated region
    $region18: #{tpu_custom_call.1} parent=1 // pred_check
      _
    $region19: #{tpu_custom_call.1} parent=1 // pred_check_branch
      %62 = sbr.rel (0) target = $region21
    $region20: #{tpu_custom_call.1} parent=1 // pred_region
      %63 = dma.done [#allocation3], 1024
    $region21: #{tpu_custom_call.1} parent=1 // pred_fallthru
      _
    // Predicated region
    $region22: #{tpu_custom_call.1} parent=1 // pred_check
      _
    $region23: #{tpu_custom_call.1} parent=1 // pred_check_branch
      %65 = sbr.rel (0) target = $region25
    $region24: #{tpu_custom_call.1} parent=1 // pred_region
      %66 = dma.done [#allocation6], 1024
    $region25: #{tpu_custom_call.1} parent=1 // pred_fallthru
      _
    // Predicated region
    $region26: #{tpu_custom_call.1} parent=1 // pred_check
      _
    $region27: #{tpu_custom_call.1} parent=1 // pred_check_branch
      %68 = sbr.rel (0) target = $region29
    $region28: #{tpu_custom_call.1} parent=1 // pred_region
      %69 = dma.done [#allocation6], 256
    $region29: #{tpu_custom_call.1} parent=1 // pred_fallthru
      _
    // Predicated region
    $region30: #{tpu_custom_call.1} parent=1 // pred_check
      _
    $region31: #{tpu_custom_call.1} parent=1 // pred_check_branch
      %71 = sbr.rel (0) target = $region33
    $region32: #{tpu_custom_call.1} parent=1 // pred_region
      %72 = dma.done [#allocation9], 256
    $region33: #{tpu_custom_call.1} parent=1 // pred_fallthru
      _
    %v73 = vld [vmem:[#allocation7] sm:$0xff]
    %v74 = vld [vmem:[#allocation7 + $0x8] sm:$0xff]
    %v75 = vld [vmem:[#allocation8] sm:$0xff]
    %v76 = vld [vmem:[#allocation8 + $0x8] sm:$0xff]
    %v77 = vld [vmem:[#allocation2] sm:$0xff]
    %v78 = vld [vmem:[#allocation2 + $0x8] sm:$0xff]
    %v79 = vld [vmem:[#allocation2 + $0x10] sm:$0xff]
    %v80 = vld [vmem:[#allocation2 + $0x18] sm:$0xff]
    %v81 = vmax.f32 %v77, 0.0
    %v82 = vmax.f32 %v78, 0.0
    %v83 = vmax.f32 %v79, 0.0
    %v84 = vmax.f32 %v80, 0.0
    %vm85 = vcmask 130048
    %v87 = vsel %vm85, %v73, 0
    %v90 = vsel %vm85, %v74, 0
    %92 = vmatprep.subr.mxu0 0.0
    %93 = vmatpush1.msra.mxu0 0.0
    %94 = vmatprep.subr.mxu0 0.0
    %95 = vmatpush1.msra.mxu0 0.0
    %96 = vmatprep.subr.mxu0 0.0
    %97 = vmatpush1.msra.mxu0 0.0
    %98 = vmatprep.subr.mxu0 0.0
    %99 = vmatpush1.msra.mxu0 0.0
    %100 = vmatprep.subr.mxu0 0.0
    %101 = vmatpush1.msra.mxu0 0.0
    %102 = vmatprep.subr.mxu0 0.0
    %103 = vmatpush1.msra.mxu0 0.0
    %104 = vmatprep.subr.mxu0 0.0
    %105 = vmatpush1.msra.mxu0 0.0
    %106 = vmatprep.subr.mxu0 0.0
    %107 = vmatpush1.msra.mxu0 0.0
    %108 = vmatprep.subr.mxu0 0.0
    %109 = vmatpush1.msra.mxu0 0.0
    %110 = vmatprep.subr.mxu0 0.0
    %111 = vmatpush1.msra.mxu0 0.0
    %112 = vmatprep.subr.mxu0 0.0
    %113 = vmatpush1.msra.mxu0 0.0
    %114 = vmatprep.subr.mxu0 0.0
    %115 = vmatpush1.msra.mxu0 0.0
    %116 = vmatprep.subr.mxu0 0.0
    %117 = vmatpush1.msra.mxu0 0.0
    %118 = vmatprep.subr.mxu0 0.0
    %119 = vmatpush1.msra.mxu0 0.0
    %120 = vmatprep.subr.mxu0 %v84
    %121 = vmatpush1.msra.mxu0 %v83
    %122 = vmatprep.subr.mxu0 %v82
    %123 = vmatpush1.msra.mxu0 %v81
    %124 = vmatprep.subr.mxu0 0.0
    %125 = vmatpush2.msra.mxu0 0.0
    %126 = vmatprep.subr.mxu0 0.0
    %127 = vmatpush2.msra.mxu0 0.0
    %128 = vmatprep.subr.mxu0 0.0
    %129 = vmatpush2.msra.mxu0 0.0
    %130 = vmatprep.subr.mxu0 0.0
    %131 = vmatpush2.msra.mxu0 0.0
    %132 = vmatprep.subr.mxu0 0.0
    %133 = vmatpush2.msra.mxu0 0.0
    %134 = vmatprep.subr.mxu0 0.0
    %135 = vmatpush2.msra.mxu0 0.0
    %136 = vmatprep.subr.mxu0 0.0
    %137 = vmatpush2.msra.mxu0 0.0
    %138 = vmatprep.subr.mxu0 0.0
    %139 = vmatpush2.msra.mxu0 0.0
    %140 = vmatprep.subr.mxu0 0.0
    %141 = vmatpush2.msra.mxu0 0.0
    %142 = vmatprep.subr.mxu0 0.0
    %143 = vmatpush2.msra.mxu0 0.0
    %144 = vmatprep.subr.mxu0 0.0
    %145 = vmatpush2.msra.mxu0 0.0
    %146 = vmatprep.subr.mxu0 0.0
    %147 = vmatpush2.msra.mxu0 0.0
    %148 = vmatprep.subr.mxu0 0.0
    %149 = vmatpush2.msra.mxu0 0.0
    %150 = vmatprep.subr.mxu0 0.0
    %151 = vmatpush2.msra.mxu0 0.0
    %152 = vmatprep.subr.mxu0 0.0
    %153 = vmatpush2.msra.mxu0 0.0
    %154 = vmatprep.subr.mxu0 0.0
    %155 = vmatpush2.msra.mxu0 0.0
    %156 = vmatprep.mubr.f32.mxu0 0.0
    %157 = vmatmul.mubr.f32.gmra.mxu0 %v87
    %v158 = vpop.f32.mrf.mxu0
    %v159 = vadd.f32 0.0, %v158
    %v160 = vpop.f32.mrf.mxu0
    %v161 = vadd.f32 0.0, %v160
    %162 = vmatprep.mubr.f32.mxu0 0.0
    %163 = vmatmul.mubr.f32.gmra.mxu0 %v90
    %v164 = vpop.f32.mrf.mxu0
    %v165 = vadd.f32 0.0, %v164
    %v166 = vpop.f32.mrf.mxu0
    %v167 = vadd.f32 0.0, %v166
    %168 = vdwg.mxu0
    %v169 = vld [vmem:[#allocation5] sm:$0xff]
    %v170 = vld [vmem:[#allocation5 + $0x8] sm:$0xff]
    %v171 = vld [vmem:[#allocation5 + $0x10] sm:$0xff]
    %v172 = vld [vmem:[#allocation5 + $0x18] sm:$0xff]
    %v173 = vmax.f32 %v169, 0.0
    %v174 = vmax.f32 %v170, 0.0
    %v175 = vmax.f32 %v171, 0.0
    %v176 = vmax.f32 %v172, 0.0
    %v178 = vsel %vm85, %v75, 0
    %v181 = vsel %vm85, %v76, 0
    %183 = vmatprep.subr.mxu0 0.0
    %184 = vmatpush1.msra.mxu0 0.0
    %185 = vmatprep.subr.mxu0 0.0
    %186 = vmatpush1.msra.mxu0 0.0
    %187 = vmatprep.subr.mxu0 0.0
    %188 = vmatpush1.msra.mxu0 0.0
    %189 = vmatprep.subr.mxu0 0.0
    %190 = vmatpush1.msra.mxu0 0.0
    %191 = vmatprep.subr.mxu0 0.0
    %192 = vmatpush1.msra.mxu0 0.0
    %193 = vmatprep.subr.mxu0 0.0
    %194 = vmatpush1.msra.mxu0 0.0
    %195 = vmatprep.subr.mxu0 0.0
    %196 = vmatpush1.msra.mxu0 0.0
    %197 = vmatprep.subr.mxu0 0.0
    %198 = vmatpush1.msra.mxu0 0.0
    %199 = vmatprep.subr.mxu0 0.0
    %200 = vmatpush1.msra.mxu0 0.0
    %201 = vmatprep.subr.mxu0 0.0
    %202 = vmatpush1.msra.mxu0 0.0
    %203 = vmatprep.subr.mxu0 0.0
    %204 = vmatpush1.msra.mxu0 0.0
    %205 = vmatprep.subr.mxu0 0.0
    %206 = vmatpush1.msra.mxu0 0.0
    %207 = vmatprep.subr.mxu0 0.0
    %208 = vmatpush1.msra.mxu0 0.0
    %209 = vmatprep.subr.mxu0 0.0
    %210 = vmatpush1.msra.mxu0 0.0
    %211 = vmatprep.subr.mxu0 %v176
    %212 = vmatpush1.msra.mxu0 %v175
    %213 = vmatprep.subr.mxu0 %v174
    %214 = vmatpush1.msra.mxu0 %v173
    %215 = vmatprep.subr.mxu0 0.0
    %216 = vmatpush2.msra.mxu0 0.0
    %217 = vmatprep.subr.mxu0 0.0
    %218 = vmatpush2.msra.mxu0 0.0
    %219 = vmatprep.subr.mxu0 0.0
    %220 = vmatpush2.msra.mxu0 0.0
    %221 = vmatprep.subr.mxu0 0.0
    %222 = vmatpush2.msra.mxu0 0.0
    %223 = vmatprep.subr.mxu0 0.0
    %224 = vmatpush2.msra.mxu0 0.0
    %225 = vmatprep.subr.mxu0 0.0
    %226 = vmatpush2.msra.mxu0 0.0
    %227 = vmatprep.subr.mxu0 0.0
    %228 = vmatpush2.msra.mxu0 0.0
    %229 = vmatprep.subr.mxu0 0.0
    %230 = vmatpush2.msra.mxu0 0.0
    %231 = vmatprep.subr.mxu0 0.0
    %232 = vmatpush2.msra.mxu0 0.0
    %233 = vmatprep.subr.mxu0 0.0
    %234 = vmatpush2.msra.mxu0 0.0
    %235 = vmatprep.subr.mxu0 0.0
    %236 = vmatpush2.msra.mxu0 0.0
    %237 = vmatprep.subr.mxu0 0.0
    %238 = vmatpush2.msra.mxu0 0.0
    %239 = vmatprep.subr.mxu0 0.0
    %240 = vmatpush2.msra.mxu0 0.0
    %241 = vmatprep.subr.mxu0 0.0
    %242 = vmatpush2.msra.mxu0 0.0
    %243 = vmatprep.subr.mxu0 0.0
    %244 = vmatpush2.msra.mxu0 0.0
    %245 = vmatprep.subr.mxu0 0.0
    %246 = vmatpush2.msra.mxu0 0.0
    %247 = vmatprep.mubr.f32.mxu0 0.0
    %248 = vmatmul.mubr.f32.gmra.mxu0 %v178
    %v249 = vpop.f32.mrf.mxu0
    %v250 = vadd.f32 0.0, %v249
    %v251 = vpop.f32.mrf.mxu0
    %v252 = vadd.f32 0.0, %v251
    %253 = vmatprep.mubr.f32.mxu0 0.0
    %254 = vmatmul.mubr.f32.gmra.mxu0 %v181
    %v255 = vpop.f32.mrf.mxu0
    %v256 = vadd.f32 0.0, %v255
    %v257 = vpop.f32.mrf.mxu0
    %v258 = vadd.f32 0.0, %v257
    %259 = vdwg.mxu0
    %v260 = vadd.f32 %v159, %v161
    %261 = vadd.xlane.f32.xlu0 %v260
    %v262 = vpop.xlane.xlu0 %261
    %v263 = vadd.f32 %v165, %v167
    %264 = vadd.xlane.f32.xlu0 %v263
    %v265 = vpop.xlane.xlu0 %264
    %v266 = vadd.f32 %v262, 0.0
    %v267 = vadd.f32 %v265, 0.0
    %v268 = vmul.f32 %v159, %v159
    %v269 = vmul.f32 %v161, %v161
    %v270 = vmul.f32 %v165, %v165
    %v271 = vmul.f32 %v167, %v167
    %v272 = vadd.f32 %v268, %v269
    %273 = vadd.xlane.f32.xlu0 %v272
    %v274 = vpop.xlane.xlu0 %273
    %v275 = vadd.f32 %v270, %v271
    %276 = vadd.xlane.f32.xlu0 %v275
    %v277 = vpop.xlane.xlu0 %276
    %v278 = vadd.f32 %v274, 0.0
    %v279 = vadd.f32 %v277, 0.0
    %v280 = vadd.f32 %v250, %v252
    %281 = vadd.xlane.f32.xlu0 %v280
    %v282 = vpop.xlane.xlu0 %281
    %v283 = vadd.f32 %v256, %v258
    %284 = vadd.xlane.f32.xlu0 %v283
    %v285 = vpop.xlane.xlu0 %284
    %v286 = vadd.f32 %v282, 0.0
    %v287 = vadd.f32 %v285, 0.0
    %v288 = vmul.f32 %v250, %v250
    %v289 = vmul.f32 %v252, %v252
    %v290 = vmul.f32 %v256, %v256
    %v291 = vmul.f32 %v258, %v258
    %v292 = vadd.f32 %v288, %v289
    %293 = vadd.xlane.f32.xlu0 %v292
    %v294 = vpop.xlane.xlu0 %293
    %v295 = vadd.f32 %v290, %v291
    %296 = vadd.xlane.f32.xlu0 %v295
    %v297 = vpop.xlane.xlu0 %296
    %v298 = vadd.f32 %v294, 0.0
    %v299 = vadd.f32 %v297, 0.0
    %s300 = scalar_lea.vmem [#allocation2], 32
    %v301 = vld [vmem:[%s300] sm:$0xff]
    %v302 = vld [vmem:[%s300 + $0x8] sm:$0xff]
    %v303 = vld [vmem:[%s300 + $0x10] sm:$0xff]
    %v304 = vld [vmem:[%s300 + $0x18] sm:$0xff]
    %v305 = vmax.f32 %v301, 0.0
    %v306 = vmax.f32 %v302, 0.0
    %v307 = vmax.f32 %v303, 0.0
    %v308 = vmax.f32 %v304, 0.0
    %309 = vmatprep.subr.mxu0 0.0
    %310 = vmatpush1.msra.mxu0 0.0
    %311 = vmatprep.subr.mxu0 0.0
    %312 = vmatpush1.msra.mxu0 0.0
    %313 = vmatprep.subr.mxu0 0.0
    %314 = vmatpush1.msra.mxu0 0.0
    %315 = vmatprep.subr.mxu0 0.0
    %316 = vmatpush1.msra.mxu0 0.0
    %317 = vmatprep.subr.mxu0 0.0
    %318 = vmatpush1.msra.mxu0 0.0
    %319 = vmatprep.subr.mxu0 0.0
    %320 = vmatpush1.msra.mxu0 0.0
    %321 = vmatprep.subr.mxu0 0.0
    %322 = vmatpush1.msra.mxu0 0.0
    %323 = vmatprep.subr.mxu0 0.0
    %324 = vmatpush1.msra.mxu0 0.0
    %325 = vmatprep.subr.mxu0 0.0
    %326 = vmatpush1.msra.mxu0 0.0
    %327 = vmatprep.subr.mxu0 0.0
    %328 = vmatpush1.msra.mxu0 0.0
    %329 = vmatprep.subr.mxu0 0.0
    %330 = vmatpush1.msra.mxu0 0.0
    %331 = vmatprep.subr.mxu0 0.0
    %332 = vmatpush1.msra.mxu0 0.0
    %333 = vmatprep.subr.mxu0 0.0
    %334 = vmatpush1.msra.mxu0 0.0
    %335 = vmatprep.subr.mxu0 0.0
    %336 = vmatpush1.msra.mxu0 0.0
    %337 = vmatprep.subr.mxu0 %v308
    %338 = vmatpush1.msra.mxu0 %v307
    %339 = vmatprep.subr.mxu0 %v306
    %340 = vmatpush1.msra.mxu0 %v305
    %341 = vmatprep.subr.mxu0 0.0
    %342 = vmatpush2.msra.mxu0 0.0
    %343 = vmatprep.subr.mxu0 0.0
    %344 = vmatpush2.msra.mxu0 0.0
    %345 = vmatprep.subr.mxu0 0.0
    %346 = vmatpush2.msra.mxu0 0.0
    %347 = vmatprep.subr.mxu0 0.0
    %348 = vmatpush2.msra.mxu0 0.0
    %349 = vmatprep.subr.mxu0 0.0
    %350 = vmatpush2.msra.mxu0 0.0
    %351 = vmatprep.subr.mxu0 0.0
    %352 = vmatpush2.msra.mxu0 0.0
    %353 = vmatprep.subr.mxu0 0.0
    %354 = vmatpush2.msra.mxu0 0.0
    %355 = vmatprep.subr.mxu0 0.0
    %356 = vmatpush2.msra.mxu0 0.0
    %357 = vmatprep.subr.mxu0 0.0
    %358 = vmatpush2.msra.mxu0 0.0
    %359 = vmatprep.subr.mxu0 0.0
    %360 = vmatpush2.msra.mxu0 0.0
    %361 = vmatprep.subr.mxu0 0.0
    %362 = vmatpush2.msra.mxu0 0.0
    %363 = vmatprep.subr.mxu0 0.0
    %364 = vmatpush2.msra.mxu0 0.0
    %365 = vmatprep.subr.mxu0 0.0
    %366 = vmatpush2.msra.mxu0 0.0
    %367 = vmatprep.subr.mxu0 0.0
    %368 = vmatpush2.msra.mxu0 0.0
    %369 = vmatprep.subr.mxu0 0.0
    %370 = vmatpush2.msra.mxu0 0.0
    %371 = vmatprep.subr.mxu0 0.0
    %372 = vmatpush2.msra.mxu0 0.0
    %373 = vmatprep.mubr.f32.mxu0 0.0
    %374 = vmatmul.mubr.f32.gmra.mxu0 %v87
    %v375 = vpop.f32.mrf.mxu0
    %v376 = vadd.f32 0.0, %v375
    %v377 = vpop.f32.mrf.mxu0
    %v378 = vadd.f32 0.0, %v377
    %379 = vmatprep.mubr.f32.mxu0 0.0
    %380 = vmatmul.mubr.f32.gmra.mxu0 %v90
    %v381 = vpop.f32.mrf.mxu0
    %v382 = vadd.f32 0.0, %v381
    %v383 = vpop.f32.mrf.mxu0
    %v384 = vadd.f32 0.0, %v383
    %385 = vdwg.mxu0
    %s386 = scalar_lea.vmem [#allocation5], 32
    %v387 = vld [vmem:[%s386] sm:$0xff]
    %v388 = vld [vmem:[%s386 + $0x8] sm:$0xff]
    %v389 = vld [vmem:[%s386 + $0x10] sm:$0xff]
    %v390 = vld [vmem:[%s386 + $0x18] sm:$0xff]
    %v391 = vmax.f32 %v387, 0.0
    %v392 = vmax.f32 %v388, 0.0
    %v393 = vmax.f32 %v389, 0.0
    %v394 = vmax.f32 %v390, 0.0
    %395 = vmatprep.subr.mxu0 0.0
    %396 = vmatpush1.msra.mxu0 0.0
    %397 = vmatprep.subr.mxu0 0.0
    %398 = vmatpush1.msra.mxu0 0.0
    %399 = vmatprep.subr.mxu0 0.0
    %400 = vmatpush1.msra.mxu0 0.0
    %401 = vmatprep.subr.mxu0 0.0
    %402 = vmatpush1.msra.mxu0 0.0
    %403 = vmatprep.subr.mxu0 0.0
    %404 = vmatpush1.msra.mxu0 0.0
    %405 = vmatprep.subr.mxu0 0.0
    %406 = vmatpush1.msra.mxu0 0.0
    %407 = vmatprep.subr.mxu0 0.0
    %408 = vmatpush1.msra.mxu0 0.0
    %409 = vmatprep.subr.mxu0 0.0
    %410 = vmatpush1.msra.mxu0 0.0
    %411 = vmatprep.subr.mxu0 0.0
    %412 = vmatpush1.msra.mxu0 0.0
    %413 = vmatprep.subr.mxu0 0.0
    %414 = vmatpush1.msra.mxu0 0.0
    %415 = vmatprep.subr.mxu0 0.0
    %416 = vmatpush1.msra.mxu0 0.0
    %417 = vmatprep.subr.mxu0 0.0
    %418 = vmatpush1.msra.mxu0 0.0
    %419 = vmatprep.subr.mxu0 0.0
    %420 = vmatpush1.msra.mxu0 0.0
    %421 = vmatprep.subr.mxu0 0.0
    %422 = vmatpush1.msra.mxu0 0.0
    %423 = vmatprep.subr.mxu0 %v394
    %424 = vmatpush1.msra.mxu0 %v393
    %425 = vmatprep.subr.mxu0 %v392
    %426 = vmatpush1.msra.mxu0 %v391
    %427 = vmatprep.subr.mxu0 0.0
    %428 = vmatpush2.msra.mxu0 0.0
    %429 = vmatprep.subr.mxu0 0.0
    %430 = vmatpush2.msra.mxu0 0.0
    %431 = vmatprep.subr.mxu0 0.0
    %432 = vmatpush2.msra.mxu0 0.0
    %433 = vmatprep.subr.mxu0 0.0
    %434 = vmatpush2.msra.mxu0 0.0
    %435 = vmatprep.subr.mxu0 0.0
    %436 = vmatpush2.msra.mxu0 0.0
    %437 = vmatprep.subr.mxu0 0.0
    %438 = vmatpush2.msra.mxu0 0.0
    %439 = vmatprep.subr.mxu0 0.0
    %440 = vmatpush2.msra.mxu0 0.0
    %441 = vmatprep.subr.mxu0 0.0
    %442 = vmatpush2.msra.mxu0 0.0
    %443 = vmatprep.subr.mxu0 0.0
    %444 = vmatpush2.msra.mxu0 0.0
    %445 = vmatprep.subr.mxu0 0.0
    %446 = vmatpush2.msra.mxu0 0.0
    %447 = vmatprep.subr.mxu0 0.0
    %448 = vmatpush2.msra.mxu0 0.0
    %449 = vmatprep.subr.mxu0 0.0
    %450 = vmatpush2.msra.mxu0 0.0
    %451 = vmatprep.subr.mxu0 0.0
    %452 = vmatpush2.msra.mxu0 0.0
    %453 = vmatprep.subr.mxu0 0.0
    %454 = vmatpush2.msra.mxu0 0.0
    %455 = vmatprep.subr.mxu0 0.0
    %456 = vmatpush2.msra.mxu0 0.0
    %457 = vmatprep.subr.mxu0 0.0
    %458 = vmatpush2.msra.mxu0 0.0
    %459 = vmatprep.mubr.f32.mxu0 0.0
    %460 = vmatmul.mubr.f32.gmra.mxu0 %v178
    %v461 = vpop.f32.mrf.mxu0
    %v462 = vadd.f32 0.0, %v461
    %v463 = vpop.f32.mrf.mxu0
    %v464 = vadd.f32 0.0, %v463
    %465 = vmatprep.mubr.f32.mxu0 0.0
    %466 = vmatmul.mubr.f32.gmra.mxu0 %v181
    %v467 = vpop.f32.mrf.mxu0
    %v468 = vadd.f32 0.0, %v467
    %v469 = vpop.f32.mrf.mxu0
    %v470 = vadd.f32 0.0, %v469
    %471 = vdwg.mxu0
    %v472 = vadd.f32 %v376, %v378
    %473 = vadd.xlane.f32.xlu0 %v472
    %v474 = vpop.xlane.xlu0 %473
    %v475 = vadd.f32 %v382, %v384
    %476 = vadd.xlane.f32.xlu0 %v475
    %v477 = vpop.xlane.xlu0 %476
    %v478 = vadd.f32 %v266, %v474
    %v479 = vadd.f32 %v267, %v477
    %v480 = vmul.f32 %v376, %v376
    %v481 = vmul.f32 %v378, %v378
    %v482 = vmul.f32 %v382, %v382
    %v483 = vmul.f32 %v384, %v384
    %v484 = vadd.f32 %v480, %v481
    %485 = vadd.xlane.f32.xlu0 %v484
    %v486 = vpop.xlane.xlu0 %485
    %v487 = vadd.f32 %v482, %v483
    %488 = vadd.xlane.f32.xlu0 %v487
    %v489 = vpop.xlane.xlu0 %488
    %v490 = vadd.f32 %v278, %v486
    %v491 = vadd.f32 %v279, %v489
    %v492 = vadd.f32 %v462, %v464
    %493 = vadd.xlane.f32.xlu0 %v492
    %v494 = vpop.xlane.xlu0 %493
    %v495 = vadd.f32 %v468, %v470
    %496 = vadd.xlane.f32.xlu0 %v495
    %v497 = vpop.xlane.xlu0 %496
    %v498 = vadd.f32 %v286, %v494
    %v499 = vadd.f32 %v287, %v497
    %v500 = vmul.f32 %v462, %v462
    %v501 = vmul.f32 %v464, %v464
    %v502 = vmul.f32 %v468, %v468
    %v503 = vmul.f32 %v470, %v470
    %v504 = vadd.f32 %v500, %v501
    %505 = vadd.xlane.f32.xlu0 %v504
    %v506 = vpop.xlane.xlu0 %505
    %v507 = vadd.f32 %v502, %v503
    %508 = vadd.xlane.f32.xlu0 %v507
    %v509 = vpop.xlane.xlu0 %508
    %v510 = vadd.f32 %v298, %v506
    %v511 = vadd.f32 %v299, %v509
    %v512 = vmul.f32 %v478, 0.001953125
    %v513 = vmul.f32 %v479, 0.001953125
    %v514 = vmul.f32 %v490, 0.001953125
    %v515 = vmul.f32 %v491, 0.001953125
    %v516 = vmul.f32 %v512, %v512
    %v517 = vmul.f32 %v513, %v513
    %v518 = vsub.f32 %v514, %v516
    %v519 = vsub.f32 %v515, %v517
    %v520 = vmax.f32 %v518, 0.0
    %v521 = vmax.f32 %v519, 0.0
    %v522 = vadd.f32 %v520, 1e-05
    %v523 = vadd.f32 %v521, 1e-05
    %v524 = vrsqrt.pop %v522
    %v525 = vrsqrt.pop %v523
    %v526 = vsub.f32 0.0, %v512
    %v527 = vsub.f32 0.0, %v513
    %v528 = vmul.f32 %v526, %v524
    %v529 = vmul.f32 %v527, %v525
    %v530 = vmul.f32 %v498, 0.001953125
    %v531 = vmul.f32 %v499, 0.001953125
    %v532 = vmul.f32 %v510, 0.001953125
    %v533 = vmul.f32 %v511, 0.001953125
    %v534 = vmul.f32 %v530, %v530
    %v535 = vmul.f32 %v531, %v531
    %v536 = vsub.f32 %v532, %v534
    %v537 = vsub.f32 %v533, %v535
    %v538 = vmax.f32 %v536, 0.0
    %v539 = vmax.f32 %v537, 0.0
    %v540 = vadd.f32 %v538, 1e-05
    %v541 = vadd.f32 %v539, 1e-05
    %v542 = vrsqrt.pop %v540
    %v543 = vrsqrt.pop %v541
    %v544 = vsub.f32 0.0, %v530
    %v545 = vsub.f32 0.0, %v531
    %v546 = vmul.f32 %v544, %v542
    %v547 = vmul.f32 %v545, %v543
    %v548 = vmul.f32 %v159, %v524
    %v549 = vmul.f32 %v161, %v524
    %v550 = vmul.f32 %v165, %v525
    %v551 = vmul.f32 %v167, %v525
    %v552 = vadd.f32 %v548, %v528
    %v553 = vadd.f32 %v549, %v528
    %v554 = vadd.f32 %v550, %v529
    %v555 = vadd.f32 %v551, %v529
    %v556 = vmul.f32 %v250, %v542
    %v557 = vmul.f32 %v252, %v542
    %v558 = vmul.f32 %v256, %v543
    %v559 = vmul.f32 %v258, %v543
    %v560 = vadd.f32 %v556, %v546
    %v561 = vadd.f32 %v557, %v546
    %v562 = vadd.f32 %v558, %v547
    %v563 = vadd.f32 %v559, %v547
    %v564 = vadd.f32 %v552, %v560
    %v565 = vadd.f32 %v553, %v561
    %v566 = vadd.f32 %v554, %v562
    %v567 = vadd.f32 %v555, %v563
    %568 = vst [vmem:[#allocation10] sm:$0xff] %v564
    %569 = vst [vmem:[#allocation10 + $0x8] sm:$0xff] %v565
    %570 = vst [vmem:[#allocation10 + $0x10] sm:$0xff] %v566
    %571 = vst [vmem:[#allocation10 + $0x18] sm:$0xff] %v567
    %v572 = vadd.f32 %v560, %v564
    %v573 = vadd.f32 %v561, %v565
    %v574 = vadd.f32 %v562, %v566
    %v575 = vadd.f32 %v563, %v567
    %576 = vst [vmem:[#allocation10 + $0x20] sm:$0xff] %v572
    %577 = vst [vmem:[#allocation10 + $0x28] sm:$0xff] %v573
    %578 = vst [vmem:[#allocation10 + $0x30] sm:$0xff] %v574
    %579 = vst [vmem:[#allocation10 + $0x38] sm:$0xff] %v575
    %v580 = vadd.f32 %v564, %v572
    %v581 = vadd.f32 %v565, %v573
    %v582 = vadd.f32 %v566, %v574
    %v583 = vadd.f32 %v567, %v575
    %584 = vst [vmem:[#allocation10 + $0x40] sm:$0xff] %v580
    %585 = vst [vmem:[#allocation10 + $0x48] sm:$0xff] %v581
    %586 = vst [vmem:[#allocation10 + $0x50] sm:$0xff] %v582
    %587 = vst [vmem:[#allocation10 + $0x58] sm:$0xff] %v583
    %v588 = vadd.f32 %v572, %v580
    %v589 = vadd.f32 %v573, %v581
    %v590 = vadd.f32 %v574, %v582
    %v591 = vadd.f32 %v575, %v583
    %592 = vst [vmem:[#allocation10 + $0x60] sm:$0xff] %v588
    %593 = vst [vmem:[#allocation10 + $0x68] sm:$0xff] %v589
    %594 = vst [vmem:[#allocation10 + $0x70] sm:$0xff] %v590
    %595 = vst [vmem:[#allocation10 + $0x78] sm:$0xff] %v591
    %v596 = vmul.f32 %v376, %v524
    %v597 = vmul.f32 %v378, %v524
    %v598 = vmul.f32 %v382, %v525
    %v599 = vmul.f32 %v384, %v525
    %v600 = vadd.f32 %v596, %v528
    %v601 = vadd.f32 %v597, %v528
    %v602 = vadd.f32 %v598, %v529
    %v603 = vadd.f32 %v599, %v529
    %v604 = vmul.f32 %v462, %v542
    %v605 = vmul.f32 %v464, %v542
    %v606 = vmul.f32 %v468, %v543
    %v607 = vmul.f32 %v470, %v543
    %v608 = vadd.f32 %v604, %v546
    %v609 = vadd.f32 %v605, %v546
    %v610 = vadd.f32 %v606, %v547
    %v611 = vadd.f32 %v607, %v547
    %v612 = vadd.f32 %v600, %v608
    %v613 = vadd.f32 %v601, %v609
    %v614 = vadd.f32 %v602, %v610
    %v615 = vadd.f32 %v603, %v611
    %s616 = scalar_lea.vmem [#allocation10], 128
    %617 = vst [vmem:[%s616] sm:$0xff] %v612
    %618 = vst [vmem:[%s616 + $0x8] sm:$0xff] %v613
    %619 = vst [vmem:[%s616 + $0x10] sm:$0xff] %v614
    %620 = vst [vmem:[%s616 + $0x18] sm:$0xff] %v615
    %v621 = vadd.f32 %v608, %v612
    %v622 = vadd.f32 %v609, %v613
    %v623 = vadd.f32 %v610, %v614
    %v624 = vadd.f32 %v611, %v615
    %625 = vst [vmem:[%s616 + $0x20] sm:$0xff] %v621
    %626 = vst [vmem:[%s616 + $0x28] sm:$0xff] %v622
    %627 = vst [vmem:[%s616 + $0x30] sm:$0xff] %v623
    %628 = vst [vmem:[%s616 + $0x38] sm:$0xff] %v624
    %v629 = vadd.f32 %v612, %v621
    %v630 = vadd.f32 %v613, %v622
    %v631 = vadd.f32 %v614, %v623
    %v632 = vadd.f32 %v615, %v624
    %633 = vst [vmem:[%s616 + $0x40] sm:$0xff] %v629
    %634 = vst [vmem:[%s616 + $0x48] sm:$0xff] %v630
    %635 = vst [vmem:[%s616 + $0x50] sm:$0xff] %v631
    %636 = vst [vmem:[%s616 + $0x58] sm:$0xff] %v632
    %v637 = vadd.f32 %v621, %v629
    %v638 = vadd.f32 %v622, %v630
    %v639 = vadd.f32 %v623, %v631
    %v640 = vadd.f32 %v624, %v632
    %641 = vst [vmem:[%s616 + $0x60] sm:$0xff] %v637
    %642 = vst [vmem:[%s616 + $0x68] sm:$0xff] %v638
    %643 = vst [vmem:[%s616 + $0x70] sm:$0xff] %v639
    %644 = vst [vmem:[%s616 + $0x78] sm:$0xff] %v640
    // Predicated region
    $region34: #{tpu_custom_call.1} parent=1 // pred_check
      _
    $region35: #{tpu_custom_call.1} parent=1 // pred_check_branch
      %646 = sbr.rel (0) target = $region37
    $region36: #{tpu_custom_call.1} parent=1 // pred_region
      %s648 = ssub.s32 4096, 4096
      %649 = vsyncadd [#allocation4], %s648
      %s650 = sshll.u32 [#allocation10], 4
      %s651 = int_to_ptr.vmem [resolvable:$true] %s650
      %656 = dma.vmem_to_hbm [thread:$0]  %s651, 4096, %s4, [#allocation4], 256, 256, 16
    $region37: #{tpu_custom_call.1} parent=1 // pred_fallthru
      _
    // Predicated region
    $region38: #{tpu_custom_call.1} parent=1 // pred_check
      _
    $region39: #{tpu_custom_call.1} parent=1 // pred_check_branch
      %658 = sbr.rel (0) target = $region41
    $region40: #{tpu_custom_call.1} parent=1 // pred_region
      %659 = dma.done [#allocation4], 4096
    $region41: #{tpu_custom_call.1} parent=1 // pred_fallthru
      _
    %660 = vsyncpa [#allocation3], 1
    %661 = vsyncpa [#allocation6], 1
    %662 = vsyncpa [#allocation9], 1
    %663 = vsyncpa [#allocation4], 1

</llo_original>
